<compile_context>
chip_gen: v5e
topology: v5e:2x2
jax: 0.10.0
libtpu: 0.0.40
codegen_flags: <defaults>
</compile_context>

<pallas_src>
import functools
import math

import jax
import jax.numpy as jnp
from jax.experimental import pallas as pl
from jax.experimental.pallas import tpu as pltpu


def _round_up(x: int, m: int) -> int:
    return ((x + m - 1) // m) * m


def _pick_tile(n_pad: int, cap: int) -> int:
    """Largest multiple of 128 that is <= cap and divides n_pad."""
    best = 128
    t = 128
    while t <= min(cap, n_pad):
        if n_pad % t == 0:
            best = t
        t += 128
    return best


def _vmem_estimate(tm: int, tk: int, n_pad: int, d_pad: int, k_resident: bool) -> int:
    q_bytes = 2 * tm * d_pad * 2                                   # double-buffered bf16 row panel
    k_bytes = 2 * (n_pad if k_resident else tk) * d_pad * 2        # bf16 col panel (or resident)
    inter = 3 * tm * tk * 4                                        # logits / sim / masked-sim f32
    acc = 2 * tm * 128 * 4                                         # lane-dense accumulators
    return q_bytes + k_bytes + inter + acc + (256 << 10)


def _default_bf16_exp() -> bool:
    # bf16 EUP exists on v6e / v7x only (v5e has no bf16 VPU/EUP).
    try:
        kind = jax.devices()[0].device_kind.lower()
    except Exception:
        return False
    return ("v6" in kind) or ("v7" in kind)


def _contrastive_kernel(q_ref, k_ref, labq_ref, labk_ref, out_ref,
                        row_acc, pos_acc, *,
                        margin: float, shift: float, pad_correction: float,
                        n_valid: int, tm: int, tk: int,
                        k_resident: bool, exp_dtype):
    i = pl.program_id(0)
    j = pl.program_id(1)

    @pl.when(j == 0)
    def _():
        row_acc[...] = jnp.zeros_like(row_acc)
        pos_acc[...] = jnp.zeros_like(pos_acc)

    # Pre-normalized, pre-scaled bf16 features straight off HBM (no per-step
    # rsqrt / scale / cast — hoisted into the wrapper).
    q = q_ref[...]                                          # (tm, d_pad) bf16
    if k_resident:
        off = pl.multiple_of(j * tk, tk)
        k = k_ref[pl.ds(off, tk), :]                        # slice the VMEM-resident panel
    else:
        k = k_ref[...]                                      # (tk, d_pad) bf16

    # (tm, tk) logits = cos_sim / temperature, MXU with f32 accumulation.
    logits = jax.lax.dot_general(
        q, k, dimension_numbers=(((1,), (1,)), ((), ())),
        preferred_element_type=jnp.float32)

    if shift != 0.0:
        logits = logits - shift                              # only for extreme temperatures

    # exp: bf16 on v6e/v7x (EUP 2x), f32 elsewhere; accumulation stays f32.
    if exp_dtype == jnp.float32:
        sim = jnp.exp(logits)
    else:
        sim = jnp.exp(logits.astype(exp_dtype)).astype(jnp.float32)

    pos = labq_ref[...] == labk_ref[...]                     # (tm,1)==(1,tk) -> (tm,tk)
    psim = jnp.where(pos, sim, jnp.asarray(0.0, dtype=sim.dtype))

    # Deferred reduction: fold tk lanes into 128 lanes with plain, vreg-aligned
    # VPU adds (no XLU work per step); accumulators stay lane-dense.
    n_grp = tk // 128
    r_part = sim[:, 0:128]
    p_part = psim[:, 0:128]
    for g in range(1, n_grp):
        r_part = r_part + sim[:, g * 128:(g + 1) * 128]
        p_part = p_part + psim[:, g * 128:(g + 1) * 128]
    row_acc[...] += r_part
    pos_acc[...] += p_part

    @pl.when(j == pl.num_programs(1) - 1)
    def _():
        # Single cross-lane reduce per row tile.
        row_sum = jnp.sum(row_acc[...], axis=1, keepdims=True)      # (tm, 1)
        pos_sum = jnp.sum(pos_acc[...], axis=1, keepdims=True)      # (tm, 1)
        # Padded (zero-vector) columns each contributed exp(0 - shift): subtract
        # their constant total instead of masking every N^2 element.
        row_sum = row_sum - pad_correction
        # neg mask is never built: neg_sum = row_sum - pos_sum (clamped so the
        # all-positive case gives log(0) = -inf -> relu -> 0, like the reference).
        neg_sum = jnp.maximum(row_sum - pos_sum, 0.0)
        log_row = jnp.log(row_sum)
        per_row = (log_row - jnp.log(pos_sum)                                  # -log(pos/row)
                   + jnp.maximum(jnp.log(neg_sum) - log_row - margin, 0.0))    # relu(...)
        # Mask padded rows and partial-sum the tile so the output store is a
        # lane-dense (1, 128) block (no masked vst.msk partial stores).
        rid = jax.lax.broadcasted_iota(jnp.int32, (tm, 1), 0) + i * tm
        per_row = jnp.where(rid < n_valid, per_row, 0.0)
        tile_sum = jnp.sum(per_row, axis=0, keepdims=True)                     # (1, 1)
        out_ref[...] = jnp.broadcast_to(tile_sum, out_ref.shape)               # (1, 128)


def contrastive_loss(features: jax.Array, labels: jax.Array,
                     margin: float = 0.5, temperature: float = 0.5,
                     bf16_exp: bool | None = None) -> jax.Array:
    """Pallas implementation of ContrastiveLoss.forward.

    features: (N, D) float array
    labels:   (N,)   integer class labels
    returns:  scalar f32 loss
    """
    n, d = features.shape
    if bf16_exp is None:
        bf16_exp = _default_bf16_exp()

    d_pad = _round_up(d, 128)
    n_pad = _round_up(n, 128)

    # ---- tile plan (sized against an explicit VMEM budget; v7x = 64 MiB phys) ----
    tm = _pick_tile(n_pad, 512)
    tk = _pick_tile(n_pad, 1024)
    # Keep the whole bf16 column panel VMEM-resident when small -> k is DMA'd
    # exactly once instead of re-streamed (n_pad/tm) times from HBM.
    k_resident = (n_pad * d_pad * 2) <= (4 << 20)
    budget = 20 << 20
    if k_resident and _vmem_estimate(tm, tk, n_pad, d_pad, True) > budget:
        k_resident = False
    while _vmem_estimate(tm, tk, n_pad, d_pad, k_resident) > budget and tk > 128:
        tk = _pick_tile(n_pad, tk - 128)
    while _vmem_estimate(tm, tk, n_pad, d_pad, k_resident) > budget and tm > 128:
        tm = _pick_tile(n_pad, tm - 128)
    # Even row-tile count so v7x's 2 TensorCores split the parallel axis evenly.
    n_row_tiles = n_pad // tm
    if n_row_tiles > 1 and n_row_tiles % 2 == 1 and tm % 256 == 0:
        tm //= 2
    n_row_tiles = n_pad // tm

    # ---- hoisted pre-pass: normalize, fold 1/sqrt(T), cast to bf16, pad ----
    scale = 1.0 / math.sqrt(float(temperature))
    feats = features.astype(jnp.float32)
    norm = jnp.sqrt(jnp.sum(feats * feats, axis=1, keepdims=True))
    fn = (feats * (scale / jnp.maximum(norm, 1e-12))).astype(jnp.bfloat16)  # F.normalize eps
    if d_pad != d:
        fn = jnp.pad(fn, ((0, 0), (0, d_pad - d)))
    if n_pad != n:
        fn = jnp.pad(fn, ((0, n_pad - n), (0, 0)))          # zero rows -> exp(0)=1, corrected later

    lab = labels.astype(jnp.int32)
    if n_pad != n:
        lab = jnp.pad(lab, (0, n_pad - n), constant_values=-(2 ** 31))  # sentinel: never matches
    lab_col = lab.reshape(n_pad, 1)
    lab_row = lab.reshape(1, n_pad)

    # Constant shift only for extreme temperatures (keeps exp in f32 range);
    # the loss only depends on ratios, so it is mathematically a no-op.
    inv_t = 1.0 / float(temperature)
    shift = inv_t if inv_t > 60.0 else 0.0
    pad_correction = float(n_pad - n) * math.exp(-shift)

    kernel = functools.partial(
        _contrastive_kernel,
        margin=float(margin), shift=shift, pad_correction=pad_correction,
        n_valid=n, tm=tm, tk=tk, k_resident=k_resident,
        exp_dtype=(jnp.bfloat16 if bf16_exp else jnp.float32))

    if k_resident:
        k_spec = pl.BlockSpec((n_pad, d_pad), lambda i, j: (0, 0))   # DMA'd once, stays in VMEM
    else:
        k_spec = pl.BlockSpec((tk, d_pad), lambda i, j: (j, 0))

    grid = (n_row_tiles, n_pad // tk)
    grid_spec = pltpu.PrefetchScalarGridSpec(
        num_scalar_prefetch=0,
        grid=grid,
        in_specs=[
            pl.BlockSpec((tm, d_pad), lambda i, j: (i, 0)),          # row-tile features (bf16)
            k_spec,                                                  # col features (bf16)
            pl.BlockSpec((tm, 1), lambda i, j: (i, 0)),              # row-tile labels
            pl.BlockSpec((1, tk), lambda i, j: (0, j)),              # col-tile labels (lane-dense)
        ],
        out_specs=pl.BlockSpec((1, 128), lambda i, j: (i, 0)),       # lane-dense per-tile partial sum
        scratch_shapes=[
            pltpu.VMEM((tm, 128), jnp.float32),                      # lane-dense row_sum accumulator
            pltpu.VMEM((tm, 128), jnp.float32),                      # lane-dense pos_sum accumulator
        ],
    )

    k_stream_rows = n_pad if k_resident else n_row_tiles * n_pad
    cost = pl.CostEstimate(
        flops=2 * n_pad * n_pad * d_pad,
        transcendentals=n_pad * n_pad,
        bytes_accessed=(n_pad + k_stream_rows) * d_pad * 2 + 2 * n_pad * 4 + n_row_tiles * 128 * 4,
    )

    partial = pl.pallas_call(
        kernel,
        out_shape=jax.ShapeDtypeStruct((n_row_tiles, 128), jnp.float32),
        grid_spec=grid_spec,
        compiler_params=pltpu.CompilerParams(
            dimension_semantics=("parallel", "arbitrary"),
            vmem_limit_bytes=32 * 1024 * 1024),
        cost_estimate=cost,
    )(fn, fn, lab_col, lab_row)

    # Tiny epilogue: sum one scalar per row tile, mean over the real rows.
    return jnp.sum(partial[:, 0]) / float(n)


def _reference_loss(features, labels, margin=0.5, temperature=0.5):
    # Pure-JAX reference mirroring the PyTorch forward, for validation.
    f = features / jnp.linalg.norm(features, axis=1, keepdims=True)
    sim = jnp.exp((f @ f.T) / temperature)
    lab = labels.reshape(-1, 1)
    pos = (lab == lab.T)
    neg = ~pos
    row_sum = sim.sum(axis=1)
    pos_loss = -jnp.mean(jnp.log((sim * pos).sum(axis=1) / row_sum))
    neg_loss = jnp.mean(jax.nn.relu(jnp.log((sim * neg).sum(axis=1) / row_sum) - margin))
    return pos_loss + neg_loss


if __name__ == "__main__":
    key = jax.random.PRNGKey(0)
    k_feat, k_lab, k_feat2, k_lab2 = jax.random.split(key, 4)

    # Small shapes consistent with (N, D) features / (N,) labels.
    N, D = 8, 32
    features = jax.random.normal(k_feat, (N, D), dtype=jnp.float32)
    labels = jax.random.randint(k_lab, (N,), 0, 3, dtype=jnp.int32)

    loss = jax.block_until_ready(contrastive_loss(features, labels, margin=0.5, temperature=0.5))
    ref = _reference_loss(features, labels, margin=0.5, temperature=0.5)
    # bf16 MXU operands (f32 accumulate) -> loosened tolerance vs the f32 reference.
    assert jnp.allclose(loss, ref, atol=5e-2, rtol=5e-2), (loss, ref)

    # Second check: non-aligned N/D exercising padding, the pad-count correction,
    # the lane-dense accumulators and the partial-sum epilogue.
    N2, D2 = 300, 40
    features2 = jax.random.normal(k_feat2, (N2, D2), dtype=jnp.float32)
    labels2 = jax.random.randint(k_lab2, (N2,), 0, 6, dtype=jnp.int32)
    loss2 = jax.block_until_ready(
        contrastive_loss(features2, labels2, margin=0.5, temperature=0.5))
    ref2 = _reference_loss(features2, labels2, margin=0.5, temperature=0.5)
    assert jnp.allclose(loss2, ref2, atol=5e-2, rtol=5e-2), (loss2, ref2)

    print("KERNEL_OK")
</pallas_src>

<mosaic_0001>
module attributes {stable_mosaic.version = 11 : i64} {
  func.func @_contrastive_kernel(%arg0: i32, %arg1: i32, %arg2: memref<128x128xbf16, #tpu.memory_space<vmem>>, %arg3: memref<128x128xbf16, #tpu.memory_space<vmem>>, %arg4: memref<128x1xi32, #tpu.memory_space<vmem>>, %arg5: memref<1x128xi32, #tpu.memory_space<vmem>>, %arg6: memref<1x128xf32, #tpu.memory_space<vmem>>, %arg7: memref<128x128xf32, #tpu.memory_space<vmem>>, %arg8: memref<128x128xf32, #tpu.memory_space<vmem>>) attributes {dimension_semantics = [#tpu.dimension_semantics<parallel>, #tpu.dimension_semantics<arbitrary>], iteration_bounds = array<i64: 1, 1>, scalar_prefetch = 0 : i64, scratch_operands = 2 : i64, tpu.core_type = #tpu.core_type<tc>, window_params = [{transform_indices = @transform_0, window_bounds = array<i64: 128, 128>}, {pipeline_mode = #tpu.pipeline_mode<synchronous>, transform_indices = @transform_1, window_bounds = array<i64: 128, 128>}, {transform_indices = @transform_2, window_bounds = array<i64: 128, 1>}, {transform_indices = @transform_3, window_bounds = array<i64: 1, 128>}, {transform_indices = @transform_4, window_bounds = array<i64: 1, 128>}]} {
    %c0_i32 = arith.constant 0 : i32
    %0 = arith.cmpi eq, %arg1, %c0_i32 : i32
    %1 = arith.extui %0 : i1 to i32
    %c0_i32_0 = arith.constant 0 : i32
    %2 = arith.cmpi ne, %1, %c0_i32_0 : i32
    scf.if %2 {
      %cst_18 = arith.constant 0.000000e+00 : f32
      %26 = vector.broadcast %cst_18 : f32 to vector<128x128xf32>
      %c0_19 = arith.constant 0 : index
      %c0_20 = arith.constant 0 : index
      %27 = vector.load %arg7[%c0_19, %c0_20] : memref<128x128xf32, #tpu.memory_space<vmem>>, vector<128x128xf32>
      tpu.vector_store %arg7[%c0_19, %c0_20], %26 {strides = array<i32>} : memref<128x128xf32, #tpu.memory_space<vmem>>, vector<128x128xf32>,
      %cst_21 = arith.constant 0.000000e+00 : f32
      %28 = vector.broadcast %cst_21 : f32 to vector<128x128xf32>
      %c0_22 = arith.constant 0 : index
      %c0_23 = arith.constant 0 : index
      %29 = vector.load %arg8[%c0_22, %c0_23] : memref<128x128xf32, #tpu.memory_space<vmem>>, vector<128x128xf32>
      tpu.vector_store %arg8[%c0_22, %c0_23], %28 {strides = array<i32>} : memref<128x128xf32, #tpu.memory_space<vmem>>, vector<128x128xf32>,
    } else {
    }
    %c0 = arith.constant 0 : index
    %c0_1 = arith.constant 0 : index
    %3 = vector.load %arg2[%c0, %c0_1] : memref<128x128xbf16, #tpu.memory_space<vmem>>, vector<128x128xbf16>
    %c128_i32 = arith.constant 128 : i32
    %4 = arith.muli %arg1, %c128_i32 : i32
    %5 = tpu.assume_multiple %4, 128 : i32
    %6 = arith.index_cast %5 : i32 to index
    %c0_2 = arith.constant 0 : index
    %7 = vector.load %arg3[%6, %c0_2] : memref<128x128xbf16, #tpu.memory_space<vmem>>, vector<128x128xbf16>
    %cst = arith.constant dense<0.000000e+00> : vector<128x128xf32>
    %8 = tpu.matmul %3, %7, %cst {dimension_numbers = #tpu.dot_dimension_numbers<[1], [1], [0], [0], [0, 0, 1, 0], [], []>} : vector<128x128xbf16>, vector<128x128xbf16>, vector<128x128xf32> -> vector<128x128xf32>
    %9 = math.exp %8 : vector<128x128xf32>
    %c0_3 = arith.constant 0 : index
    %c0_4 = arith.constant 0 : index
    %10 = vector.load %arg4[%c0_3, %c0_4] : memref<128x1xi32, #tpu.memory_space<vmem>>, vector<128x1xi32>
    %c0_5 = arith.constant 0 : index
    %c0_6 = arith.constant 0 : index
    %11 = vector.load %arg5[%c0_5, %c0_6] : memref<1x128xi32, #tpu.memory_space<vmem>>, vector<1x128xi32>
    %12 = vector.broadcast %10 : vector<128x1xi32> to vector<128x128xi32>
    %13 = vector.broadcast %11 : vector<1x128xi32> to vector<128x128xi32>
    %14 = arith.cmpi eq, %12, %13 : vector<128x128xi32>
    %cst_7 = arith.constant 0.000000e+00 : f32
    %15 = vector.broadcast %cst_7 : f32 to vector<128x128xf32>
    %16 = arith.select %14, %9, %15 : vector<128x128xi1>, vector<128x128xf32>
    %c0_8 = arith.constant 0 : index
    %c0_9 = arith.constant 0 : index
    %17 = vector.load %arg7[%c0_8, %c0_9] : memref<128x128xf32, #tpu.memory_space<vmem>>, vector<128x128xf32>
    %18 = arith.addf %17, %9 : vector<128x128xf32>
    %c0_10 = arith.constant 0 : index
    %c0_11 = arith.constant 0 : index
    %19 = vector.load %arg7[%c0_10, %c0_11] : memref<128x128xf32, #tpu.memory_space<vmem>>, vector<128x128xf32>
    tpu.vector_store %arg7[%c0_10, %c0_11], %18 {strides = array<i32>} : memref<128x128xf32, #tpu.memory_space<vmem>>, vector<128x128xf32>,
    %c0_12 = arith.constant 0 : index
    %c0_13 = arith.constant 0 : index
    %20 = vector.load %arg8[%c0_12, %c0_13] : memref<128x128xf32, #tpu.memory_space<vmem>>, vector<128x128xf32>
    %21 = arith.addf %20, %16 : vector<128x128xf32>
    %c0_14 = arith.constant 0 : index
    %c0_15 = arith.constant 0 : index
    %22 = vector.load %arg8[%c0_14, %c0_15] : memref<128x128xf32, #tpu.memory_space<vmem>>, vector<128x128xf32>
    tpu.vector_store %arg8[%c0_14, %c0_15], %21 {strides = array<i32>} : memref<128x128xf32, #tpu.memory_space<vmem>>, vector<128x128xf32>,
    %c0_i32_16 = arith.constant 0 : i32
    %23 = arith.cmpi eq, %arg1, %c0_i32_16 : i32
    %24 = arith.extui %23 : i1 to i32
    %c0_i32_17 = arith.constant 0 : i32
    %25 = arith.cmpi ne, %24, %c0_i32_17 : i32
    scf.if %25 {
      %c0_18 = arith.constant 0 : index
      %c0_19 = arith.constant 0 : index
      %26 = vector.load %arg7[%c0_18, %c0_19] : memref<128x128xf32, #tpu.memory_space<vmem>>, vector<128x128xf32>
      %cst_20 = arith.constant dense<0.000000e+00> : vector<128xf32>
      %27 = vector.multi_reduction <add>, %26, %cst_20 [1] : vector<128x128xf32> to vector<128xf32>
      %28 = vector.shape_cast %27 : vector<128xf32> to vector<128x1xf32>
      %c0_21 = arith.constant 0 : index
      %c0_22 = arith.constant 0 : index
      %29 = vector.load %arg8[%c0_21, %c0_22] : memref<128x128xf32, #tpu.memory_space<vmem>>, vector<128x128xf32>
      %cst_23 = arith.constant dense<0.000000e+00> : vector<128xf32>
      %30 = vector.multi_reduction <add>, %29, %cst_23 [1] : vector<128x128xf32> to vector<128xf32>
      %31 = vector.shape_cast %30 : vector<128xf32> to vector<128x1xf32>
      %cst_24 = arith.constant 1.200000e+02 : f32
      %32 = vector.broadcast %cst_24 : f32 to vector<128x1xf32>
      %33 = arith.subf %28, %32 : vector<128x1xf32>
      %34 = arith.subf %33, %31 : vector<128x1xf32>
      %cst_25 = arith.constant 0.000000e+00 : f32
      %35 = vector.broadcast %cst_25 : f32 to vector<128x1xf32>
      %36 = arith.maximumf %34, %35 : vector<128x1xf32>
      %37 = math.log %33 : vector<128x1xf32>
      %38 = math.log %31 : vector<128x1xf32>
      %39 = arith.subf %37, %38 : vector<128x1xf32>
      %40 = math.log %36 : vector<128x1xf32>
      %41 = arith.subf %40, %37 : vector<128x1xf32>
      %cst_26 = arith.constant 5.000000e-01 : f32
      %42 = vector.broadcast %cst_26 : f32 to vector<128x1xf32>
      %43 = arith.subf %41, %42 : vector<128x1xf32>
      %cst_27 = arith.constant 0.000000e+00 : f32
      %44 = vector.broadcast %cst_27 : f32 to vector<128x1xf32>
      %45 = arith.maximumf %43, %44 : vector<128x1xf32>
      %46 = arith.addf %39, %45 : vector<128x1xf32>
      %47 = tpu.iota {dimensions = array<i32: 0>} : vector<128x1xi32>
      %c128_i32_28 = arith.constant 128 : i32
      %48 = arith.muli %arg0, %c128_i32_28 : i32
      %49 = vector.broadcast %48 : i32 to vector<128x1xi32>
      %50 = arith.addi %47, %49 : vector<128x1xi32>
      %c8_i32 = arith.constant 8 : i32
      %51 = vector.broadcast %c8_i32 : i32 to vector<128x1xi32>
      %52 = arith.cmpi slt, %50, %51 : vector<128x1xi32>
      %cst_29 = arith.constant 0.000000e+00 : f32
      %53 = vector.broadcast %cst_29 : f32 to vector<128x1xf32>
      %54 = arith.select %52, %46, %53 : vector<128x1xi1>, vector<128x1xf32>
      %cst_30 = arith.constant dense<0.000000e+00> : vector<1xf32>
      %55 = vector.multi_reduction <add>, %54, %cst_30 [0] : vector<128x1xf32> to vector<1xf32>
      %56 = vector.shape_cast %55 : vector<1xf32> to vector<1x1xf32>
      %57 = vector.shape_cast %56 : vector<1x1xf32> to vector<1x1xf32>
      %58 = vector.broadcast %57 : vector<1x1xf32> to vector<1x128xf32>
      %c0_31 = arith.constant 0 : index
      %c0_32 = arith.constant 0 : index
      %59 = vector.load %arg6[%c0_31, %c0_32] : memref<1x128xf32, #tpu.memory_space<vmem>>, vector<1x128xf32>
      tpu.vector_store %arg6[%c0_31, %c0_32], %58 {strides = array<i32>} : memref<1x128xf32, #tpu.memory_space<vmem>>, vector<1x128xf32>,
    } else {
    }
    return
  }
  func.func @transform_0(%arg0: i32, %arg1: i32) -> (i32, i32) {
    %c0_i32 = arith.constant 0 : i32
    %c0_i32_0 = arith.constant 0 : i32
    return %arg0, %c0_i32 : i32, i32
  }
  func.func @transform_1(%arg0: i32, %arg1: i32) -> (i32, i32) {
    %c0_i32 = arith.constant 0 : i32
    %c0_i32_0 = arith.constant 0 : i32
    %c0_i32_1 = arith.constant 0 : i32
    return %c0_i32, %c0_i32_0 : i32, i32
  }
  func.func @transform_2(%arg0: i32, %arg1: i32) -> (i32, i32) {
    %c0_i32 = arith.constant 0 : i32
    %c0_i32_0 = arith.constant 0 : i32
    return %arg0, %c0_i32 : i32, i32
  }
  func.func @transform_3(%arg0: i32, %arg1: i32) -> (i32, i32) {
    %c0_i32 = arith.constant 0 : i32
    %c0_i32_0 = arith.constant 0 : i32
    return %c0_i32, %arg1 : i32, i32
  }
  func.func @transform_4(%arg0: i32, %arg1: i32) -> (i32, i32) {
    %c0_i32 = arith.constant 0 : i32
    %c0_i32_0 = arith.constant 0 : i32
    return %arg0, %c0_i32 : i32, i32
  }
}

</mosaic_0001>

<llo_original>
// kernel: tpu_custom_call.1
$region0: #{tpu_custom_call.1}
  #allocation0 [shape = 'u32[]', space=smem, size = 0x4, offset = 0x4, fixed_abs, tag = 'smem constant byte address 0x4 - core index']
  #allocation1 [shape = 'u32[72,128]{1,0:T(1,128)}', space=vmem, size = 0x9000, scoped, tag = 'internal scratch']
  #allocation2 [shape = 'f32[128,128]{1,0:T(8,128)}', space=vmem, size = 0x10000, scoped, tag = 'scratch operand']
  #allocation3 [shape = 'f32[128,128]{1,0:T(8,128)}', space=vmem, size = 0x10000, scoped, tag = 'scratch operand']
  %s0 = inlined_call_operand.vmem [shape: bf16[128,128], index: 0, kind: input, shape index: {}]
  %s1 = inlined_call_operand.vmem [shape: bf16[128,128], index: 1, kind: input, shape index: {}]
  %s2 = inlined_call_operand.vmem [shape: s32[128,1], index: 2, kind: input, shape index: {}]
  %s3 = inlined_call_operand.vmem [shape: s32[1,128], index: 3, kind: input, shape index: {}]
  %s4 = inlined_call_operand.hbm [shape: f32[1,128], index: 4, kind: output, shape index: {}]
  %s5 = sld [smem:[#allocation0]]
  $region34: #{tpu_custom_call.1} parent=0
    _
  %s7 = ssub.s32 1, %s5
  %s8 = scalar_select 0, %s7, %s5
  $region1: #{tpu_custom_call.1} parent=0
    #allocation4 [shape = 'u8[512]{0}', space=vmem, size = 0x400, scoped, tag = 'output window, operand 0, single buffered']
    #allocation5 [shape = 's32[1]{0}', space=sflag, size = 0x4, scoped, tag = 'scoped memory for tpu_custom_call.1']
    %9 = vsyncpa [#allocation5], 0
    // Predicated region
    $region2: #{tpu_custom_call.1} parent=1 // pred_check
      _
    $region3: #{tpu_custom_call.1} parent=1 // pred_check_branch
      %11 = sbr.rel (0) target = $region5
    $region4: #{tpu_custom_call.1} parent=1 // pred_region
      _
    $region5: #{tpu_custom_call.1} parent=1 // pred_fallthru
      _
    // Predicated region
    $region6: #{tpu_custom_call.1} parent=1 // pred_check
      _
    $region7: #{tpu_custom_call.1} parent=1 // pred_check_branch
      %13 = sbr.rel (0) target = $region9
    $region8: #{tpu_custom_call.1} parent=1 // pred_region
      _
    $region9: #{tpu_custom_call.1} parent=1 // pred_fallthru
      _
    // Predicated region
    $region10: #{tpu_custom_call.1} parent=1 // pred_check
      _
    $region11: #{tpu_custom_call.1} parent=1 // pred_check_branch
      %15 = sbr.rel (0) target = $region13
    $region12: #{tpu_custom_call.1} parent=1 // pred_region
      _
    $region13: #{tpu_custom_call.1} parent=1 // pred_fallthru
      _
    // Predicated region
    $region14: #{tpu_custom_call.1} parent=1 // pred_check
      _
    $region15: #{tpu_custom_call.1} parent=1 // pred_check_branch
      %17 = sbr.rel (0) target = $region17
    $region16: #{tpu_custom_call.1} parent=1 // pred_region
      _
    $region17: #{tpu_custom_call.1} parent=1 // pred_fallthru
      _
    %p18 = scmp.eq.s32.totalorder 0, 0
    // Predicated region
    $region18: #{tpu_custom_call.1} parent=1 // pred_check
      %p19 = pneg %p18
    $region19: #{tpu_custom_call.1} parent=1 // pred_check_branch
      %21 = sbr.rel (%p19) target = $region21
    $region20: #{tpu_custom_call.1} parent=1 // pred_region
      %22 = vst [vmem:[#allocation2] sm:$0xff] 0.0
      %23 = vst [vmem:[#allocation2 + $0x8] sm:$0xff] 0.0
      %24 = vst [vmem:[#allocation2 + $0x10] sm:$0xff] 0.0
      %25 = vst [vmem:[#allocation2 + $0x18] sm:$0xff] 0.0
      %26 = vst [vmem:[#allocation2 + $0x20] sm:$0xff] 0.0
      %27 = vst [vmem:[#allocation2 + $0x28] sm:$0xff] 0.0
      %28 = vst [vmem:[#allocation2 + $0x30] sm:$0xff] 0.0
      %29 = vst [vmem:[#allocation2 + $0x38] sm:$0xff] 0.0
      %30 = vst [vmem:[#allocation2 + $0x40] sm:$0xff] 0.0
      %31 = vst [vmem:[#allocation2 + $0x48] sm:$0xff] 0.0
      %32 = vst [vmem:[#allocation2 + $0x50] sm:$0xff] 0.0
      %33 = vst [vmem:[#allocation2 + $0x58] sm:$0xff] 0.0
      %34 = vst [vmem:[#allocation2 + $0x60] sm:$0xff] 0.0
      %35 = vst [vmem:[#allocation2 + $0x68] sm:$0xff] 0.0
      %36 = vst [vmem:[#allocation2 + $0x70] sm:$0xff] 0.0
      %37 = vst [vmem:[#allocation2 + $0x78] sm:$0xff] 0.0
      %38 = vst [vmem:[#allocation3] sm:$0xff] 0.0
      %39 = vst [vmem:[#allocation3 + $0x8] sm:$0xff] 0.0
      %40 = vst [vmem:[#allocation3 + $0x10] sm:$0xff] 0.0
      %41 = vst [vmem:[#allocation3 + $0x18] sm:$0xff] 0.0
      %42 = vst [vmem:[#allocation3 + $0x20] sm:$0xff] 0.0
      %43 = vst [vmem:[#allocation3 + $0x28] sm:$0xff] 0.0
      %44 = vst [vmem:[#allocation3 + $0x30] sm:$0xff] 0.0
      %45 = vst [vmem:[#allocation3 + $0x38] sm:$0xff] 0.0
      %46 = vst [vmem:[#allocation3 + $0x40] sm:$0xff] 0.0
      %47 = vst [vmem:[#allocation3 + $0x48] sm:$0xff] 0.0
      %48 = vst [vmem:[#allocation3 + $0x50] sm:$0xff] 0.0
      %49 = vst [vmem:[#allocation3 + $0x58] sm:$0xff] 0.0
      %50 = vst [vmem:[#allocation3 + $0x60] sm:$0xff] 0.0
      %51 = vst [vmem:[#allocation3 + $0x68] sm:$0xff] 0.0
      %52 = vst [vmem:[#allocation3 + $0x70] sm:$0xff] 0.0
      %53 = vst [vmem:[#allocation3 + $0x78] sm:$0xff] 0.0
    $region21: #{tpu_custom_call.1} parent=1 // pred_fallthru
      _
    %v54 = vld [vmem:[%s0] sm:$0xf]
    %v55 = vld [vmem:[%s0 + $0x4] sm:$0xf]
    %v56 = vld [vmem:[%s0 + $0x8] sm:$0xf]
    %v57 = vld [vmem:[%s0 + $0xc] sm:$0xf]
    %v58 = vld [vmem:[%s0 + $0x10] sm:$0xf]
    %v59 = vld [vmem:[%s0 + $0x14] sm:$0xf]
    %v60 = vld [vmem:[%s0 + $0x18] sm:$0xf]
    %v61 = vld [vmem:[%s0 + $0x1c] sm:$0xf]
    %v62 = vld [vmem:[%s0 + $0x20] sm:$0xf]
    %v63 = vld [vmem:[%s0 + $0x24] sm:$0xf]
    %v64 = vld [vmem:[%s0 + $0x28] sm:$0xf]
    %v65 = vld [vmem:[%s0 + $0x2c] sm:$0xf]
    %v66 = vld [vmem:[%s0 + $0x30] sm:$0xf]
    %v67 = vld [vmem:[%s0 + $0x34] sm:$0xf]
    %v68 = vld [vmem:[%s0 + $0x38] sm:$0xf]
    %v69 = vld [vmem:[%s0 + $0x3c] sm:$0xf]
    %s70 = smul.u32 0, 128
    %s71 = sshra.s32 %s70, 3
    %s72 = sand.u32 %s70, 7
    %s73 = smul.addr %s71, 4
    %s74 = scalar_lea.vmem %s1, %s73
    %v75 = vld [vmem:[%s74] sm:$0xf]
    %v76 = vld [vmem:[%s74 + $0x4] sm:$0xf]
    %v77 = vld [vmem:[%s74 + $0x8] sm:$0xf]
    %v78 = vld [vmem:[%s74 + $0xc] sm:$0xf]
    %v79 = vld [vmem:[%s74 + $0x10] sm:$0xf]
    %v80 = vld [vmem:[%s74 + $0x14] sm:$0xf]
    %v81 = vld [vmem:[%s74 + $0x18] sm:$0xf]
    %v82 = vld [vmem:[%s74 + $0x1c] sm:$0xf]
    %v83 = vld [vmem:[%s74 + $0x20] sm:$0xf]
    %v84 = vld [vmem:[%s74 + $0x24] sm:$0xf]
    %v85 = vld [vmem:[%s74 + $0x28] sm:$0xf]
    %v86 = vld [vmem:[%s74 + $0x2c] sm:$0xf]
    %v87 = vld [vmem:[%s74 + $0x30] sm:$0xf]
    %v88 = vld [vmem:[%s74 + $0x34] sm:$0xf]
    %v89 = vld [vmem:[%s74 + $0x38] sm:$0xf]
    %v90 = vld [vmem:[%s74 + $0x3c] sm:$0xf]
    %v107 = vunpack.c.l.b16 %v54
    %v108 = vunpack.c.l.b16 %v55
    %v109 = vunpack.c.l.b16 %v56
    %v110 = vunpack.c.l.b16 %v57
    %v111 = vunpack.c.l.b16 %v58
    %v112 = vunpack.c.l.b16 %v59
    %v113 = vunpack.c.l.b16 %v60
    %v114 = vunpack.c.l.b16 %v61
    %v115 = vunpack.c.l.b16 %v62
    %v116 = vunpack.c.l.b16 %v63
    %v117 = vunpack.c.l.b16 %v64
    %v118 = vunpack.c.l.b16 %v65
    %v119 = vunpack.c.l.b16 %v66
    %v120 = vunpack.c.l.b16 %v67
    %v121 = vunpack.c.l.b16 %v68
    %v122 = vunpack.c.l.b16 %v69
    %v123 = vpack.c.b16 %v108, %v107
    %v124 = vpack.c.b16 %v110, %v109
    %v125 = vpack.c.b16 %v112, %v111
    %v126 = vpack.c.b16 %v114, %v113
    %v127 = vpack.c.b16 %v116, %v115
    %v128 = vpack.c.b16 %v118, %v117
    %v129 = vpack.c.b16 %v120, %v119
    %v130 = vpack.c.b16 %v122, %v121
    %v155 = vunpack.c.l.b16 %v75
    %v156 = vunpack.c.l.b16 %v76
    %v157 = vunpack.c.l.b16 %v77
    %v158 = vunpack.c.l.b16 %v78
    %v159 = vunpack.c.l.b16 %v79
    %v160 = vunpack.c.l.b16 %v80
    %v161 = vunpack.c.l.b16 %v81
    %v162 = vunpack.c.l.b16 %v82
    %v163 = vunpack.c.l.b16 %v83
    %v164 = vunpack.c.l.b16 %v84
    %v165 = vunpack.c.l.b16 %v85
    %v166 = vunpack.c.l.b16 %v86
    %v167 = vunpack.c.l.b16 %v87
    %v168 = vunpack.c.l.b16 %v88
    %v169 = vunpack.c.l.b16 %v89
    %v170 = vunpack.c.l.b16 %v90
    %v171 = vpack.c.b16 %v156, %v155
    %v172 = vpack.c.b16 %v158, %v157
    %v173 = vpack.c.b16 %v160, %v159
    %v174 = vpack.c.b16 %v162, %v161
    %v175 = vpack.c.b16 %v164, %v163
    %v176 = vpack.c.b16 %v166, %v165
    %v177 = vpack.c.b16 %v168, %v167
    %v178 = vpack.c.b16 %v170, %v169
    %187 = vmatpush.bf16.xpose.msra.mxu0 %v178
    %188 = vmatpush.bf16.xpose.msra.mxu0 %v177
    %189 = vmatpush.bf16.xpose.msra.mxu0 %v176
    %190 = vmatpush.bf16.xpose.msra.mxu0 %v175
    %191 = vmatpush.bf16.xpose.msra.mxu0 %v174
    %192 = vmatpush.bf16.xpose.msra.mxu0 %v173
    %193 = vmatpush.bf16.xpose.msra.mxu0 %v172
    %194 = vmatpush.bf16.xpose.msra.mxu0 %v171
    %195 = vmatmul.bf16.gmra.mxu0 %v123
    %v196 = vpop.f32.mrf.mxu0
    %v197 = vadd.f32 0.0, %v196
    %v198 = vpop.f32.mrf.mxu0
    %v199 = vadd.f32 0.0, %v198
    %200 = vmatmul.bf16.gmra.mxu0 %v124
    %v201 = vpop.f32.mrf.mxu0
    %v202 = vadd.f32 0.0, %v201
    %v203 = vpop.f32.mrf.mxu0
    %v204 = vadd.f32 0.0, %v203
    %205 = vmatmul.bf16.gmra.mxu0 %v125
    %v206 = vpop.f32.mrf.mxu0
    %v207 = vadd.f32 0.0, %v206
    %v208 = vpop.f32.mrf.mxu0
    %v209 = vadd.f32 0.0, %v208
    %210 = vmatmul.bf16.gmra.mxu0 %v126
    %v211 = vpop.f32.mrf.mxu0
    %v212 = vadd.f32 0.0, %v211
    %v213 = vpop.f32.mrf.mxu0
    %v214 = vadd.f32 0.0, %v213
    %215 = vmatmul.bf16.gmra.mxu0 %v127
    %v216 = vpop.f32.mrf.mxu0
    %v217 = vadd.f32 0.0, %v216
    %v218 = vpop.f32.mrf.mxu0
    %v219 = vadd.f32 0.0, %v218
    %220 = vmatmul.bf16.gmra.mxu0 %v128
    %v221 = vpop.f32.mrf.mxu0
    %v222 = vadd.f32 0.0, %v221
    %v223 = vpop.f32.mrf.mxu0
    %v224 = vadd.f32 0.0, %v223
    %225 = vmatmul.bf16.gmra.mxu0 %v129
    %v226 = vpop.f32.mrf.mxu0
    %v227 = vadd.f32 0.0, %v226
    %v228 = vpop.f32.mrf.mxu0
    %v229 = vadd.f32 0.0, %v228
    %230 = vmatmul.bf16.gmra.mxu0 %v130
    %v231 = vpop.f32.mrf.mxu0
    %v232 = vadd.f32 0.0, %v231
    %v233 = vpop.f32.mrf.mxu0
    %v234 = vadd.f32 0.0, %v233
    %235 = vdwg.mxu0
    %v236 = vmul.f32 %v197, 1.442695
    %v237 = vpow.pop %v236
    %v238 = vmul.f32 %v199, 1.442695
    %v239 = vpow.pop %v238
    %v240 = vmul.f32 %v202, 1.442695
    %v241 = vpow.pop %v240
    %v242 = vmul.f32 %v204, 1.442695
    %v243 = vpow.pop %v242
    %v244 = vmul.f32 %v207, 1.442695
    %v245 = vpow.pop %v244
    %v246 = vmul.f32 %v209, 1.442695
    %v247 = vpow.pop %v246
    %v248 = vmul.f32 %v212, 1.442695
    %v249 = vpow.pop %v248
    %v250 = vmul.f32 %v214, 1.442695
    %v251 = vpow.pop %v250
    %v252 = vmul.f32 %v217, 1.442695
    %v253 = vpow.pop %v252
    %v254 = vmul.f32 %v219, 1.442695
    %v255 = vpow.pop %v254
    %v256 = vmul.f32 %v222, 1.442695
    %v257 = vpow.pop %v256
    %v258 = vmul.f32 %v224, 1.442695
    %v259 = vpow.pop %v258
    %v260 = vmul.f32 %v227, 1.442695
    %v261 = vpow.pop %v260
    %v262 = vmul.f32 %v229, 1.442695
    %v263 = vpow.pop %v262
    %v264 = vmul.f32 %v232, 1.442695
    %v265 = vpow.pop %v264
    %v266 = vmul.f32 %v234, 1.442695
    %v267 = vpow.pop %v266
    %v268 = vld [vmem:[%s2] sm:$0xff]
    %v269 = vld [vmem:[%s2 + $0x8] sm:$0xff]
    %v270 = vld [vmem:[%s2 + $0x10] sm:$0xff]
    %v271 = vld [vmem:[%s2 + $0x18] sm:$0xff]
    %v272 = vld [vmem:[%s2 + $0x20] sm:$0xff]
    %v273 = vld [vmem:[%s2 + $0x28] sm:$0xff]
    %v274 = vld [vmem:[%s2 + $0x30] sm:$0xff]
    %v275 = vld [vmem:[%s2 + $0x38] sm:$0xff]
    %v276 = vld [vmem:[%s2 + $0x40] sm:$0xff]
    %v277 = vld [vmem:[%s2 + $0x48] sm:$0xff]
    %v278 = vld [vmem:[%s2 + $0x50] sm:$0xff]
    %v279 = vld [vmem:[%s2 + $0x58] sm:$0xff]
    %v280 = vld [vmem:[%s2 + $0x60] sm:$0xff]
    %v281 = vld [vmem:[%s2 + $0x68] sm:$0xff]
    %v282 = vld [vmem:[%s2 + $0x70] sm:$0xff]
    %v283 = vld [vmem:[%s2 + $0x78] sm:$0xff]
    %v284 = vld [vmem:[%s3] sm:$0x1]
    %285 = vset.pattern.permute.xlu0 0
    %286 = vperm.xlu0 %285, %v268
    %v287 = vpop.permute.xlu0 %286
    %288 = vset.pattern.permute.xlu0 0
    %289 = vperm.xlu0 %288, %v269
    %v290 = vpop.permute.xlu0 %289
    %291 = vset.pattern.permute.xlu0 0
    %292 = vperm.xlu0 %291, %v270
    %v293 = vpop.permute.xlu0 %292
    %294 = vset.pattern.permute.xlu0 0
    %295 = vperm.xlu0 %294, %v271
    %v296 = vpop.permute.xlu0 %295
    %297 = vset.pattern.permute.xlu0 0
    %298 = vperm.xlu0 %297, %v272
    %v299 = vpop.permute.xlu0 %298
    %300 = vset.pattern.permute.xlu0 0
    %301 = vperm.xlu0 %300, %v273
    %v302 = vpop.permute.xlu0 %301
    %303 = vset.pattern.permute.xlu0 0
    %304 = vperm.xlu0 %303, %v274
    %v305 = vpop.permute.xlu0 %304
    %306 = vset.pattern.permute.xlu0 0
    %307 = vperm.xlu0 %306, %v275
    %v308 = vpop.permute.xlu0 %307
    %309 = vset.pattern.permute.xlu0 0
    %310 = vperm.xlu0 %309, %v276
    %v311 = vpop.permute.xlu0 %310
    %312 = vset.pattern.permute.xlu0 0
    %313 = vperm.xlu0 %312, %v277
    %v314 = vpop.permute.xlu0 %313
    %315 = vset.pattern.permute.xlu0 0
    %316 = vperm.xlu0 %315, %v278
    %v317 = vpop.permute.xlu0 %316
    %318 = vset.pattern.permute.xlu0 0
    %319 = vperm.xlu0 %318, %v279
    %v320 = vpop.permute.xlu0 %319
    %321 = vset.pattern.permute.xlu0 0
    %322 = vperm.xlu0 %321, %v280
    %v323 = vpop.permute.xlu0 %322
    %324 = vset.pattern.permute.xlu0 0
    %325 = vperm.xlu0 %324, %v281
    %v326 = vpop.permute.xlu0 %325
    %327 = vset.pattern.permute.xlu0 0
    %328 = vperm.xlu0 %327, %v282
    %v329 = vpop.permute.xlu0 %328
    %330 = vset.pattern.permute.xlu0 0
    %331 = vperm.xlu0 %330, %v283
    %v332 = vpop.permute.xlu0 %331
    %v333 = vperm.slane %v284, 0
    %vm334 = vcmp.eq.s32.totalorder %v287, %v333
    %vm335 = vcmp.eq.s32.totalorder %v290, %v333
    %vm336 = vcmp.eq.s32.totalorder %v293, %v333
    %vm337 = vcmp.eq.s32.totalorder %v296, %v333
    %vm338 = vcmp.eq.s32.totalorder %v299, %v333
    %vm339 = vcmp.eq.s32.totalorder %v302, %v333
    %vm340 = vcmp.eq.s32.totalorder %v305, %v333
    %vm341 = vcmp.eq.s32.totalorder %v308, %v333
    %vm342 = vcmp.eq.s32.totalorder %v311, %v333
    %vm343 = vcmp.eq.s32.totalorder %v314, %v333
    %vm344 = vcmp.eq.s32.totalorder %v317, %v333
    %vm345 = vcmp.eq.s32.totalorder %v320, %v333
    %vm346 = vcmp.eq.s32.totalorder %v323, %v333
    %vm347 = vcmp.eq.s32.totalorder %v326, %v333
    %vm348 = vcmp.eq.s32.totalorder %v329, %v333
    %vm349 = vcmp.eq.s32.totalorder %v332, %v333
    %v350 = vsel %vm334, %v237, 0.0
    %v351 = vsel %vm335, %v239, 0.0
    %v352 = vsel %vm336, %v241, 0.0
    %v353 = vsel %vm337, %v243, 0.0
    %v354 = vsel %vm338, %v245, 0.0
    %v355 = vsel %vm339, %v247, 0.0
    %v356 = vsel %vm340, %v249, 0.0
    %v357 = vsel %vm341, %v251, 0.0
    %v358 = vsel %vm342, %v253, 0.0
    %v359 = vsel %vm343, %v255, 0.0
    %v360 = vsel %vm344, %v257, 0.0
    %v361 = vsel %vm345, %v259, 0.0
    %v362 = vsel %vm346, %v261, 0.0
    %v363 = vsel %vm347, %v263, 0.0
    %v364 = vsel %vm348, %v265, 0.0
    %v365 = vsel %vm349, %v267, 0.0
    %v366 = vld [vmem:[#allocation2] sm:$0xff]
    %v367 = vld [vmem:[#allocation2 + $0x8] sm:$0xff]
    %v368 = vld [vmem:[#allocation2 + $0x10] sm:$0xff]
    %v369 = vld [vmem:[#allocation2 + $0x18] sm:$0xff]
    %v370 = vld [vmem:[#allocation2 + $0x20] sm:$0xff]
    %v371 = vld [vmem:[#allocation2 + $0x28] sm:$0xff]
    %v372 = vld [vmem:[#allocation2 + $0x30] sm:$0xff]
    %v373 = vld [vmem:[#allocation2 + $0x38] sm:$0xff]
    %v374 = vld [vmem:[#allocation2 + $0x40] sm:$0xff]
    %v375 = vld [vmem:[#allocation2 + $0x48] sm:$0xff]
    %v376 = vld [vmem:[#allocation2 + $0x50] sm:$0xff]
    %v377 = vld [vmem:[#allocation2 + $0x58] sm:$0xff]
    %v378 = vld [vmem:[#allocation2 + $0x60] sm:$0xff]
    %v379 = vld [vmem:[#allocation2 + $0x68] sm:$0xff]
    %v380 = vld [vmem:[#allocation2 + $0x70] sm:$0xff]
    %v381 = vld [vmem:[#allocation2 + $0x78] sm:$0xff]
    %v382 = vadd.f32 %v366, %v237
    %v383 = vadd.f32 %v367, %v239
    %v384 = vadd.f32 %v368, %v241
    %v385 = vadd.f32 %v369, %v243
    %v386 = vadd.f32 %v370, %v245
    %v387 = vadd.f32 %v371, %v247
    %v388 = vadd.f32 %v372, %v249
    %v389 = vadd.f32 %v373, %v251
    %v390 = vadd.f32 %v374, %v253
    %v391 = vadd.f32 %v375, %v255
    %v392 = vadd.f32 %v376, %v257
    %v393 = vadd.f32 %v377, %v259
    %v394 = vadd.f32 %v378, %v261
    %v395 = vadd.f32 %v379, %v263
    %v396 = vadd.f32 %v380, %v265
    %v397 = vadd.f32 %v381, %v267
    %398 = vst [vmem:[#allocation2] sm:$0xff] %v382
    %399 = vst [vmem:[#allocation2 + $0x8] sm:$0xff] %v383
    %400 = vst [vmem:[#allocation2 + $0x10] sm:$0xff] %v384
    %401 = vst [vmem:[#allocation2 + $0x18] sm:$0xff] %v385
    %402 = vst [vmem:[#allocation2 + $0x20] sm:$0xff] %v386
    %403 = vst [vmem:[#allocation2 + $0x28] sm:$0xff] %v387
    %404 = vst [vmem:[#allocation2 + $0x30] sm:$0xff] %v388
    %405 = vst [vmem:[#allocation2 + $0x38] sm:$0xff] %v389
    %406 = vst [vmem:[#allocation2 + $0x40] sm:$0xff] %v390
    %407 = vst [vmem:[#allocation2 + $0x48] sm:$0xff] %v391
    %408 = vst [vmem:[#allocation2 + $0x50] sm:$0xff] %v392
    %409 = vst [vmem:[#allocation2 + $0x58] sm:$0xff] %v393
    %410 = vst [vmem:[#allocation2 + $0x60] sm:$0xff] %v394
    %411 = vst [vmem:[#allocation2 + $0x68] sm:$0xff] %v395
    %412 = vst [vmem:[#allocation2 + $0x70] sm:$0xff] %v396
    %413 = vst [vmem:[#allocation2 + $0x78] sm:$0xff] %v397
    %v414 = vld [vmem:[#allocation3] sm:$0xff]
    %v415 = vld [vmem:[#allocation3 + $0x8] sm:$0xff]
    %v416 = vld [vmem:[#allocation3 + $0x10] sm:$0xff]
    %v417 = vld [vmem:[#allocation3 + $0x18] sm:$0xff]
    %v418 = vld [vmem:[#allocation3 + $0x20] sm:$0xff]
    %v419 = vld [vmem:[#allocation3 + $0x28] sm:$0xff]
    %v420 = vld [vmem:[#allocation3 + $0x30] sm:$0xff]
    %v421 = vld [vmem:[#allocation3 + $0x38] sm:$0xff]
    %v422 = vld [vmem:[#allocation3 + $0x40] sm:$0xff]
    %v423 = vld [vmem:[#allocation3 + $0x48] sm:$0xff]
    %v424 = vld [vmem:[#allocation3 + $0x50] sm:$0xff]
    %v425 = vld [vmem:[#allocation3 + $0x58] sm:$0xff]
    %v426 = vld [vmem:[#allocation3 + $0x60] sm:$0xff]
    %v427 = vld [vmem:[#allocation3 + $0x68] sm:$0xff]
    %v428 = vld [vmem:[#allocation3 + $0x70] sm:$0xff]
    %v429 = vld [vmem:[#allocation3 + $0x78] sm:$0xff]
    %v430 = vadd.f32 %v414, %v350
    %v431 = vadd.f32 %v415, %v351
    %v432 = vadd.f32 %v416, %v352
    %v433 = vadd.f32 %v417, %v353
    %v434 = vadd.f32 %v418, %v354
    %v435 = vadd.f32 %v419, %v355
    %v436 = vadd.f32 %v420, %v356
    %v437 = vadd.f32 %v421, %v357
    %v438 = vadd.f32 %v422, %v358
    %v439 = vadd.f32 %v423, %v359
    %v440 = vadd.f32 %v424, %v360
    %v441 = vadd.f32 %v425, %v361
    %v442 = vadd.f32 %v426, %v362
    %v443 = vadd.f32 %v427, %v363
    %v444 = vadd.f32 %v428, %v364
    %v445 = vadd.f32 %v429, %v365
    %446 = vst [vmem:[#allocation3] sm:$0xff] %v430
    %447 = vst [vmem:[#allocation3 + $0x8] sm:$0xff] %v431
    %448 = vst [vmem:[#allocation3 + $0x10] sm:$0xff] %v432
    %449 = vst [vmem:[#allocation3 + $0x18] sm:$0xff] %v433
    %450 = vst [vmem:[#allocation3 + $0x20] sm:$0xff] %v434
    %451 = vst [vmem:[#allocation3 + $0x28] sm:$0xff] %v435
    %452 = vst [vmem:[#allocation3 + $0x30] sm:$0xff] %v436
    %453 = vst [vmem:[#allocation3 + $0x38] sm:$0xff] %v437
    %454 = vst [vmem:[#allocation3 + $0x40] sm:$0xff] %v438
    %455 = vst [vmem:[#allocation3 + $0x48] sm:$0xff] %v439
    %456 = vst [vmem:[#allocation3 + $0x50] sm:$0xff] %v440
    %457 = vst [vmem:[#allocation3 + $0x58] sm:$0xff] %v441
    %458 = vst [vmem:[#allocation3 + $0x60] sm:$0xff] %v442
    %459 = vst [vmem:[#allocation3 + $0x68] sm:$0xff] %v443
    %460 = vst [vmem:[#allocation3 + $0x70] sm:$0xff] %v444
    %461 = vst [vmem:[#allocation3 + $0x78] sm:$0xff] %v445
    // Predicated region
    $region22: #{tpu_custom_call.1} parent=1 // pred_check
      %p462 = pneg %p18
    $region23: #{tpu_custom_call.1} parent=1 // pred_check_branch
      %464 = sbr.rel (%p462) target = $region25
    $region24: #{tpu_custom_call.1} parent=1 // pred_region
      %v465 = vld [vmem:[#allocation2] sm:$0xff]
      %v466 = vld [vmem:[#allocation2 + $0x8] sm:$0xff]
      %v467 = vld [vmem:[#allocation2 + $0x10] sm:$0xff]
      %v468 = vld [vmem:[#allocation2 + $0x18] sm:$0xff]
      %v469 = vld [vmem:[#allocation2 + $0x20] sm:$0xff]
      %v470 = vld [vmem:[#allocation2 + $0x28] sm:$0xff]
      %v471 = vld [vmem:[#allocation2 + $0x30] sm:$0xff]
      %v472 = vld [vmem:[#allocation2 + $0x38] sm:$0xff]
      %v473 = vld [vmem:[#allocation2 + $0x40] sm:$0xff]
      %v474 = vld [vmem:[#allocation2 + $0x48] sm:$0xff]
      %v475 = vld [vmem:[#allocation2 + $0x50] sm:$0xff]
      %v476 = vld [vmem:[#allocation2 + $0x58] sm:$0xff]
      %v477 = vld [vmem:[#allocation2 + $0x60] sm:$0xff]
      %v478 = vld [vmem:[#allocation2 + $0x68] sm:$0xff]
      %v479 = vld [vmem:[#allocation2 + $0x70] sm:$0xff]
      %v480 = vld [vmem:[#allocation2 + $0x78] sm:$0xff]
      %481 = vadd.xlane.f32.xlu0 %v465
      %v482 = vpop.xlane.xlu0 %481
      %483 = vadd.xlane.f32.xlu0 %v466
      %v484 = vpop.xlane.xlu0 %483
      %485 = vadd.xlane.f32.xlu0 %v467
      %v486 = vpop.xlane.xlu0 %485
      %487 = vadd.xlane.f32.xlu0 %v468
      %v488 = vpop.xlane.xlu0 %487
      %489 = vadd.xlane.f32.xlu0 %v469
      %v490 = vpop.xlane.xlu0 %489
      %491 = vadd.xlane.f32.xlu0 %v470
      %v492 = vpop.xlane.xlu0 %491
      %493 = vadd.xlane.f32.xlu0 %v471
      %v494 = vpop.xlane.xlu0 %493
      %495 = vadd.xlane.f32.xlu0 %v472
      %v496 = vpop.xlane.xlu0 %495
      %497 = vadd.xlane.f32.xlu0 %v473
      %v498 = vpop.xlane.xlu0 %497
      %499 = vadd.xlane.f32.xlu0 %v474
      %v500 = vpop.xlane.xlu0 %499
      %501 = vadd.xlane.f32.xlu0 %v475
      %v502 = vpop.xlane.xlu0 %501
      %503 = vadd.xlane.f32.xlu0 %v476
      %v504 = vpop.xlane.xlu0 %503
      %505 = vadd.xlane.f32.xlu0 %v477
      %v506 = vpop.xlane.xlu0 %505
      %507 = vadd.xlane.f32.xlu0 %v478
      %v508 = vpop.xlane.xlu0 %507
      %509 = vadd.xlane.f32.xlu0 %v479
      %v510 = vpop.xlane.xlu0 %509
      %511 = vadd.xlane.f32.xlu0 %v480
      %v512 = vpop.xlane.xlu0 %511
      %v513 = vld [vmem:[#allocation3] sm:$0xff]
      %v514 = vld [vmem:[#allocation3 + $0x8] sm:$0xff]
      %v515 = vld [vmem:[#allocation3 + $0x10] sm:$0xff]
      %v516 = vld [vmem:[#allocation3 + $0x18] sm:$0xff]
      %v517 = vld [vmem:[#allocation3 + $0x20] sm:$0xff]
      %v518 = vld [vmem:[#allocation3 + $0x28] sm:$0xff]
      %v519 = vld [vmem:[#allocation3 + $0x30] sm:$0xff]
      %v520 = vld [vmem:[#allocation3 + $0x38] sm:$0xff]
      %v521 = vld [vmem:[#allocation3 + $0x40] sm:$0xff]
      %v522 = vld [vmem:[#allocation3 + $0x48] sm:$0xff]
      %v523 = vld [vmem:[#allocation3 + $0x50] sm:$0xff]
      %v524 = vld [vmem:[#allocation3 + $0x58] sm:$0xff]
      %v525 = vld [vmem:[#allocation3 + $0x60] sm:$0xff]
      %v526 = vld [vmem:[#allocation3 + $0x68] sm:$0xff]
      %v527 = vld [vmem:[#allocation3 + $0x70] sm:$0xff]
      %v528 = vld [vmem:[#allocation3 + $0x78] sm:$0xff]
      %529 = vadd.xlane.f32.xlu0 %v513
      %v530 = vpop.xlane.xlu0 %529
      %531 = vadd.xlane.f32.xlu0 %v514
      %v532 = vpop.xlane.xlu0 %531
      %533 = vadd.xlane.f32.xlu0 %v515
      %v534 = vpop.xlane.xlu0 %533
      %535 = vadd.xlane.f32.xlu0 %v516
      %v536 = vpop.xlane.xlu0 %535
      %537 = vadd.xlane.f32.xlu0 %v517
      %v538 = vpop.xlane.xlu0 %537
      %539 = vadd.xlane.f32.xlu0 %v518
      %v540 = vpop.xlane.xlu0 %539
      %541 = vadd.xlane.f32.xlu0 %v519
      %v542 = vpop.xlane.xlu0 %541
      %543 = vadd.xlane.f32.xlu0 %v520
      %v544 = vpop.xlane.xlu0 %543
      %545 = vadd.xlane.f32.xlu0 %v521
      %v546 = vpop.xlane.xlu0 %545
      %547 = vadd.xlane.f32.xlu0 %v522
      %v548 = vpop.xlane.xlu0 %547
      %549 = vadd.xlane.f32.xlu0 %v523
      %v550 = vpop.xlane.xlu0 %549
      %551 = vadd.xlane.f32.xlu0 %v524
      %v552 = vpop.xlane.xlu0 %551
      %553 = vadd.xlane.f32.xlu0 %v525
      %v554 = vpop.xlane.xlu0 %553
      %555 = vadd.xlane.f32.xlu0 %v526
      %v556 = vpop.xlane.xlu0 %555
      %557 = vadd.xlane.f32.xlu0 %v527
      %v558 = vpop.xlane.xlu0 %557
      %559 = vadd.xlane.f32.xlu0 %v528
      %v560 = vpop.xlane.xlu0 %559
      %v561 = vsub.f32 %v482, 120.0
      %v562 = vsub.f32 %v484, 120.0
      %v563 = vsub.f32 %v486, 120.0
      %v564 = vsub.f32 %v488, 120.0
      %v565 = vsub.f32 %v490, 120.0
      %v566 = vsub.f32 %v492, 120.0
      %v567 = vsub.f32 %v494, 120.0
      %v568 = vsub.f32 %v496, 120.0
      %v569 = vsub.f32 %v498, 120.0
      %v570 = vsub.f32 %v500, 120.0
      %v571 = vsub.f32 %v502, 120.0
      %v572 = vsub.f32 %v504, 120.0
      %v573 = vsub.f32 %v506, 120.0
      %v574 = vsub.f32 %v508, 120.0
      %v575 = vsub.f32 %v510, 120.0
      %v576 = vsub.f32 %v512, 120.0
      %v577 = vsub.f32 %v561, %v530
      %v578 = vsub.f32 %v562, %v532
      %v579 = vsub.f32 %v563, %v534
      %v580 = vsub.f32 %v564, %v536
      %v581 = vsub.f32 %v565, %v538
      %v582 = vsub.f32 %v566, %v540
      %v583 = vsub.f32 %v567, %v542
      %v584 = vsub.f32 %v568, %v544
      %v585 = vsub.f32 %v569, %v546
      %v586 = vsub.f32 %v570, %v548
      %v587 = vsub.f32 %v571, %v550
      %v588 = vsub.f32 %v572, %v552
      %v589 = vsub.f32 %v573, %v554
      %v590 = vsub.f32 %v574, %v556
      %v591 = vsub.f32 %v575, %v558
      %v592 = vsub.f32 %v576, %v560
      %v593 = vmax.f32 %v577, 0.0
      %v594 = vmax.f32 %v578, 0.0
      %v595 = vmax.f32 %v579, 0.0
      %v596 = vmax.f32 %v580, 0.0
      %v597 = vmax.f32 %v581, 0.0
      %v598 = vmax.f32 %v582, 0.0
      %v599 = vmax.f32 %v583, 0.0
      %v600 = vmax.f32 %v584, 0.0
      %v601 = vmax.f32 %v585, 0.0
      %v602 = vmax.f32 %v586, 0.0
      %v603 = vmax.f32 %v587, 0.0
      %v604 = vmax.f32 %v588, 0.0
      %v605 = vmax.f32 %v589, 0.0
      %v606 = vmax.f32 %v590, 0.0
      %v607 = vmax.f32 %v591, 0.0
      %v608 = vmax.f32 %v592, 0.0
      %v609 = vlog2.pop %v561
      %v610 = vmul.f32 %v609, 0.6931472
      %v611 = vlog2.pop %v562
      %v612 = vmul.f32 %v611, 0.6931472
      %v613 = vlog2.pop %v563
      %v614 = vmul.f32 %v613, 0.6931472
      %v615 = vlog2.pop %v564
      %v616 = vmul.f32 %v615, 0.6931472
      %v617 = vlog2.pop %v565
      %v618 = vmul.f32 %v617, 0.6931472
      %v619 = vlog2.pop %v566
      %v620 = vmul.f32 %v619, 0.6931472
      %v621 = vlog2.pop %v567
      %v622 = vmul.f32 %v621, 0.6931472
      %v623 = vlog2.pop %v568
      %v624 = vmul.f32 %v623, 0.6931472
      %v625 = vlog2.pop %v569
      %v626 = vmul.f32 %v625, 0.6931472
      %v627 = vlog2.pop %v570
      %v628 = vmul.f32 %v627, 0.6931472
      %v629 = vlog2.pop %v571
      %v630 = vmul.f32 %v629, 0.6931472
      %v631 = vlog2.pop %v572
      %v632 = vmul.f32 %v631, 0.6931472
      %v633 = vlog2.pop %v573
      %v634 = vmul.f32 %v633, 0.6931472
      %v635 = vlog2.pop %v574
      %v636 = vmul.f32 %v635, 0.6931472
      %v637 = vlog2.pop %v575
      %v638 = vmul.f32 %v637, 0.6931472
      %v639 = vlog2.pop %v576
      %v640 = vmul.f32 %v639, 0.6931472
      %v641 = vlog2.pop %v530
      %v642 = vmul.f32 %v641, 0.6931472
      %v643 = vlog2.pop %v532
      %v644 = vmul.f32 %v643, 0.6931472
      %v645 = vlog2.pop %v534
      %v646 = vmul.f32 %v645, 0.6931472
      %v647 = vlog2.pop %v536
      %v648 = vmul.f32 %v647, 0.6931472
      %v649 = vlog2.pop %v538
      %v650 = vmul.f32 %v649, 0.6931472
      %v651 = vlog2.pop %v540
      %v652 = vmul.f32 %v651, 0.6931472
      %v653 = vlog2.pop %v542
      %v654 = vmul.f32 %v653, 0.6931472
      %v655 = vlog2.pop %v544
      %v656 = vmul.f32 %v655, 0.6931472
      %v657 = vlog2.pop %v546
      %v658 = vmul.f32 %v657, 0.6931472
      %v659 = vlog2.pop %v548
      %v660 = vmul.f32 %v659, 0.6931472
      %v661 = vlog2.pop %v550
      %v662 = vmul.f32 %v661, 0.6931472
      %v663 = vlog2.pop %v552
      %v664 = vmul.f32 %v663, 0.6931472
      %v665 = vlog2.pop %v554
      %v666 = vmul.f32 %v665, 0.6931472
      %v667 = vlog2.pop %v556
      %v668 = vmul.f32 %v667, 0.6931472
      %v669 = vlog2.pop %v558
      %v670 = vmul.f32 %v669, 0.6931472
      %v671 = vlog2.pop %v560
      %v672 = vmul.f32 %v671, 0.6931472
      %v673 = vsub.f32 %v610, %v642
      %v674 = vsub.f32 %v612, %v644
      %v675 = vsub.f32 %v614, %v646
      %v676 = vsub.f32 %v616, %v648
      %v677 = vsub.f32 %v618, %v650
      %v678 = vsub.f32 %v620, %v652
      %v679 = vsub.f32 %v622, %v654
      %v680 = vsub.f32 %v624, %v656
      %v681 = vsub.f32 %v626, %v658
      %v682 = vsub.f32 %v628, %v660
      %v683 = vsub.f32 %v630, %v662
      %v684 = vsub.f32 %v632, %v664
      %v685 = vsub.f32 %v634, %v666
      %v686 = vsub.f32 %v636, %v668
      %v687 = vsub.f32 %v638, %v670
      %v688 = vsub.f32 %v640, %v672
      %v689 = vlog2.pop %v593
      %v690 = vmul.f32 %v689, 0.6931472
      %v691 = vlog2.pop %v594
      %v692 = vmul.f32 %v691, 0.6931472
      %v693 = vlog2.pop %v595
      %v694 = vmul.f32 %v693, 0.6931472
      %v695 = vlog2.pop %v596
      %v696 = vmul.f32 %v695, 0.6931472
      %v697 = vlog2.pop %v597
      %v698 = vmul.f32 %v697, 0.6931472
      %v699 = vlog2.pop %v598
      %v700 = vmul.f32 %v699, 0.6931472
      %v701 = vlog2.pop %v599
      %v702 = vmul.f32 %v701, 0.6931472
      %v703 = vlog2.pop %v600
      %v704 = vmul.f32 %v703, 0.6931472
      %v705 = vlog2.pop %v601
      %v706 = vmul.f32 %v705, 0.6931472
      %v707 = vlog2.pop %v602
      %v708 = vmul.f32 %v707, 0.6931472
      %v709 = vlog2.pop %v603
      %v710 = vmul.f32 %v709, 0.6931472
      %v711 = vlog2.pop %v604
      %v712 = vmul.f32 %v711, 0.6931472
      %v713 = vlog2.pop %v605
      %v714 = vmul.f32 %v713, 0.6931472
      %v715 = vlog2.pop %v606
      %v716 = vmul.f32 %v715, 0.6931472
      %v717 = vlog2.pop %v607
      %v718 = vmul.f32 %v717, 0.6931472
      %v719 = vlog2.pop %v608
      %v720 = vmul.f32 %v719, 0.6931472
      %v721 = vsub.f32 %v690, %v610
      %v722 = vsub.f32 %v692, %v612
      %v723 = vsub.f32 %v694, %v614
      %v724 = vsub.f32 %v696, %v616
      %v725 = vsub.f32 %v698, %v618
      %v726 = vsub.f32 %v700, %v620
      %v727 = vsub.f32 %v702, %v622
      %v728 = vsub.f32 %v704, %v624
      %v729 = vsub.f32 %v706, %v626
      %v730 = vsub.f32 %v708, %v628
      %v731 = vsub.f32 %v710, %v630
      %v732 = vsub.f32 %v712, %v632
      %v733 = vsub.f32 %v714, %v634
      %v734 = vsub.f32 %v716, %v636
      %v735 = vsub.f32 %v718, %v638
      %v736 = vsub.f32 %v720, %v640
      %v737 = vsub.f32 %v721, 0.5
      %v738 = vsub.f32 %v722, 0.5
      %v739 = vsub.f32 %v723, 0.5
      %v740 = vsub.f32 %v724, 0.5
      %v741 = vsub.f32 %v725, 0.5
      %v742 = vsub.f32 %v726, 0.5
      %v743 = vsub.f32 %v727, 0.5
      %v744 = vsub.f32 %v728, 0.5
      %v745 = vsub.f32 %v729, 0.5
      %v746 = vsub.f32 %v730, 0.5
      %v747 = vsub.f32 %v731, 0.5
      %v748 = vsub.f32 %v732, 0.5
      %v749 = vsub.f32 %v733, 0.5
      %v750 = vsub.f32 %v734, 0.5
      %v751 = vsub.f32 %v735, 0.5
      %v752 = vsub.f32 %v736, 0.5
      %v753 = vmax.f32 %v737, 0.0
      %v754 = vmax.f32 %v738, 0.0
      %v755 = vmax.f32 %v739, 0.0
      %v756 = vmax.f32 %v740, 0.0
      %v757 = vmax.f32 %v741, 0.0
      %v758 = vmax.f32 %v742, 0.0
      %v759 = vmax.f32 %v743, 0.0
      %v760 = vmax.f32 %v744, 0.0
      %v761 = vmax.f32 %v745, 0.0
      %v762 = vmax.f32 %v746, 0.0
      %v763 = vmax.f32 %v747, 0.0
      %v764 = vmax.f32 %v748, 0.0
      %v765 = vmax.f32 %v749, 0.0
      %v766 = vmax.f32 %v750, 0.0
      %v767 = vmax.f32 %v751, 0.0
      %v768 = vmax.f32 %v752, 0.0
      %v769 = vadd.f32 %v673, %v753
      %v770 = vadd.f32 %v674, %v754
      %v771 = vadd.f32 %v675, %v755
      %v772 = vadd.f32 %v676, %v756
      %v773 = vadd.f32 %v677, %v757
      %v774 = vadd.f32 %v678, %v758
      %v775 = vadd.f32 %v679, %v759
      %v776 = vadd.f32 %v680, %v760
      %v777 = vadd.f32 %v681, %v761
      %v778 = vadd.f32 %v682, %v762
      %v779 = vadd.f32 %v683, %v763
      %v780 = vadd.f32 %v684, %v764
      %v781 = vadd.f32 %v685, %v765
      %v782 = vadd.f32 %v686, %v766
      %v783 = vadd.f32 %v687, %v767
      %v784 = vadd.f32 %v688, %v768
      %v785 = vlaneseq
      %v786 = vshrl.u32 %v785, 7
      %v787 = vadd.s32 %v786, 8
      %v788 = vadd.s32 %v786, 16
      %v789 = vadd.s32 %v786, 24
      %v790 = vadd.s32 %v786, 32
      %v791 = vadd.s32 %v786, 40
      %v792 = vadd.s32 %v786, 48
      %v793 = vadd.s32 %v786, 56
      %v794 = vadd.s32 %v786, 64
      %v795 = vadd.s32 %v786, 72
      %v796 = vadd.s32 %v786, 80
      %v797 = vadd.s32 %v786, 88
      %v798 = vadd.s32 %v786, 96
      %v799 = vadd.s32 %v786, 104
      %v800 = vadd.s32 %v786, 112
      %v801 = vadd.s32 %v786, 120
      %s802 = smul.u32 0, 128
      %v803 = vstv %s802
      %v804 = vadd.s32 %v786, %v803
      %v805 = vadd.s32 %v787, %v803
      %v806 = vadd.s32 %v788, %v803
      %v807 = vadd.s32 %v789, %v803
      %v808 = vadd.s32 %v790, %v803
      %v809 = vadd.s32 %v791, %v803
      %v810 = vadd.s32 %v792, %v803
      %v811 = vadd.s32 %v793, %v803
      %v812 = vadd.s32 %v794, %v803
      %v813 = vadd.s32 %v795, %v803
      %v814 = vadd.s32 %v796, %v803
      %v815 = vadd.s32 %v797, %v803
      %v816 = vadd.s32 %v798, %v803
      %v817 = vadd.s32 %v799, %v803
      %v818 = vadd.s32 %v800, %v803
      %v819 = vadd.s32 %v801, %v803
      %vm820 = vcmp.lt.s32.totalorder %v804, 8
      %vm821 = vcmp.lt.s32.totalorder %v805, 8
      %vm822 = vcmp.lt.s32.totalorder %v806, 8
      %vm823 = vcmp.lt.s32.totalorder %v807, 8
      %vm824 = vcmp.lt.s32.totalorder %v808, 8
      %vm825 = vcmp.lt.s32.totalorder %v809, 8
      %vm826 = vcmp.lt.s32.totalorder %v810, 8
      %vm827 = vcmp.lt.s32.totalorder %v811, 8
      %vm828 = vcmp.lt.s32.totalorder %v812, 8
      %vm829 = vcmp.lt.s32.totalorder %v813, 8
      %vm830 = vcmp.lt.s32.totalorder %v814, 8
      %vm831 = vcmp.lt.s32.totalorder %v815, 8
      %vm832 = vcmp.lt.s32.totalorder %v816, 8
      %vm833 = vcmp.lt.s32.totalorder %v817, 8
      %vm834 = vcmp.lt.s32.totalorder %v818, 8
      %vm835 = vcmp.lt.s32.totalorder %v819, 8
      %v836 = vsel %vm820, %v769, 0.0
      %v837 = vsel %vm821, %v770, 0.0
      %v838 = vsel %vm822, %v771, 0.0
      %v839 = vsel %vm823, %v772, 0.0
      %v840 = vsel %vm824, %v773, 0.0
      %v841 = vsel %vm825, %v774, 0.0
      %v842 = vsel %vm826, %v775, 0.0
      %v843 = vsel %vm827, %v776, 0.0
      %v844 = vsel %vm828, %v777, 0.0
      %v845 = vsel %vm829, %v778, 0.0
      %v846 = vsel %vm830, %v779, 0.0
      %v847 = vsel %vm831, %v780, 0.0
      %v848 = vsel %vm832, %v781, 0.0
      %v849 = vsel %vm833, %v782, 0.0
      %v850 = vsel %vm834, %v783, 0.0
      %v851 = vsel %vm835, %v784, 0.0
      %v852 = vadd.f32 %v836, %v837
      %v853 = vadd.f32 %v852, %v838
      %v854 = vadd.f32 %v853, %v839
      %v855 = vadd.f32 %v854, %v840
      %v856 = vadd.f32 %v855, %v841
      %v857 = vadd.f32 %v856, %v842
      %v858 = vadd.f32 %v857, %v843
      %v859 = vadd.f32 %v858, %v844
      %v860 = vadd.f32 %v859, %v845
      %v861 = vadd.f32 %v860, %v846
      %v862 = vadd.f32 %v861, %v847
      %v863 = vadd.f32 %v862, %v848
      %v864 = vadd.f32 %v863, %v849
      %v865 = vadd.f32 %v864, %v850
      %v866 = vadd.f32 %v865, %v851
      %v867 = vrot.slane %v866, 4
      %v868 = vadd.f32 %v866, %v867
      %v869 = vrot.slane %v868, 2
      %v870 = vadd.f32 %v868, %v869
      %v871 = vrot.slane %v870, 1
      %v872 = vadd.f32 %v870, %v871
      %873 = vst [vmem:[#allocation4] sm:$0x1] %v872
    $region25: #{tpu_custom_call.1} parent=1 // pred_fallthru
      _
    // Predicated region
    $region26: #{tpu_custom_call.1} parent=1 // pred_check
      _
    $region27: #{tpu_custom_call.1} parent=1 // pred_check_branch
      %875 = sbr.rel (0) target = $region29
    $region28: #{tpu_custom_call.1} parent=1 // pred_region
      %877 = vsyncadd [#allocation5], 0
      %s879 = sshll.u32 [#allocation4], 4
      %s880 = int_to_ptr.vmem [resolvable:$true] %s879
      %s881 = sshll.u32 %s4, 4
      %s882 = int_to_ptr.hbm [resolvable:$true] %s881
      %884 = dma.vmem_to_hbm [thread:$0]  %s880, 16, %s882, [#allocation5]
    $region29: #{tpu_custom_call.1} parent=1 // pred_fallthru
      _
    // Predicated region
    $region30: #{tpu_custom_call.1} parent=1 // pred_check
      _
    $region31: #{tpu_custom_call.1} parent=1 // pred_check_branch
      %886 = sbr.rel (0) target = $region33
    $region32: #{tpu_custom_call.1} parent=1 // pred_region
      %888 = dma.done [#allocation5], 16
    $region33: #{tpu_custom_call.1} parent=1 // pred_fallthru
      _
    %889 = vsyncpa [#allocation5], 1

</llo_original>
